<compile_context>
chip_gen: v7x
topology: tpu7x:2x2x1
jax: 0.10.0
libtpu: 0.0.40
codegen_flags: <defaults>
</compile_context>

<pallas_src>
import jax
import jax.numpy as jnp
from jax.experimental import pallas as pl
from jax.experimental.pallas import tpu as pltpu


def regressor_kernel(x_ref, cr_ref, w1_ref, b1_ref, w2h_ref, s_ref, out_ref):
    # x_ref  : (TB, 100) features (f32 or bf16)
    # cr_ref : (TB, 2)   col 0 = count, col 1 = readability (f32)
    # w1_ref : (100, 50) fc1 weight, (in, out) layout, same dtype as x
    # b1_ref : (1, 50)   fc1 bias (f32)
    # w2h_ref: (1, 50)   fc2 weight rows 0..49 as a row vector (f32)
    # s_ref  : (3,) SMEM [w2[50] (count), w2[51] (readability), b2]
    # out_ref: (TB, 1)   logits (f32)
    h = jnp.dot(x_ref[...], w1_ref[...], preferred_element_type=jnp.float32)
    h = h + b1_ref[...]
    # Dropout(p=0.1) -> identity at inference.  ReLU on the VPU.
    h = jnp.maximum(h, 0.0)

    # fc2 over cat([h, count, readability]), concat-free:
    #   h @ W2[:50] as VPU multiply + XLU lane reduction (keeps the MXU free).
    logit = jnp.sum(h * w2h_ref[...], axis=-1, keepdims=True)        # (TB, 1)
    cnt = cr_ref[:, 0:1]
    rdb = cr_ref[:, 1:2]
    logit = logit + cnt * s_ref[0] + rdb * s_ref[1] + s_ref[2]

    out_ref[...] = logit.astype(out_ref.dtype)


def _round_up(n, m):
    return ((n + m - 1) // m) * m


def regressor_forward(x, count, readability, params, *, block_b=8192,
                      use_bf16=True):
    """x:(B,100), count:(B,1), readability:(B,1) -> (B,1) f32 logits."""
    B = x.shape[0]
    w1, b1, w2, b2 = params["w1"], params["b1"], params["w2"], params["b2"]

    # Tiny (B, 2) f32 side stream for count/readability (~8 B/row of HBM);
    # keeps these features full precision even when x runs in bf16.
    cr = jnp.concatenate(
        [count.reshape(B, 1), readability.reshape(B, 1)], axis=1
    ).astype(jnp.float32)

    b1_2d = b1.reshape(1, 50).astype(jnp.float32)                    # (1, 50)
    # fc2 split: rows 0..49 -> h, row 50 -> count, row 51 -> readability.
    w2h = w2[:50, 0].reshape(1, 50).astype(jnp.float32)              # (1, 50)
    scal = jnp.concatenate([w2[50:52, 0], b2]).astype(jnp.float32)   # (3,)

    # bf16 halves the dominant HBM stream; accumulation stays f32 in-kernel.
    # NOTE: the win assumes x is produced/stored in bf16 upstream (cast fuses
    # with x's producer); pass use_bf16=False for f32-resident standalone x.
    in_dtype = jnp.bfloat16 if use_bf16 else jnp.float32
    x = x.astype(in_dtype)
    w1 = w1.astype(in_dtype)

    # Batch tiling.  B <= 1024: one full-array block (no (8,128) constraints).
    # Larger B: TB is a multiple of 128 so the cdiv grid's trailing partial
    # block is legal, and TB <= ~ceil(B/2) so the grid has >= 2 steps (both
    # v7x TensorCores get work).
    if B <= 1024:
        TB = B
    else:
        TB = min(block_b, _round_up(pl.cdiv(B, 2), 128))
    grid_n = pl.cdiv(B, TB)

    cost = pl.CostEstimate(
        flops=2 * B * 100 * 50 + 4 * B * 50,
        transcendentals=0,
        bytes_accessed=int(x.size * x.dtype.itemsize + cr.size * 4
                           + w1.size * w1.dtype.itemsize
                           + 2 * 50 * 4 + 3 * 4 + B * 4),
    )

    out = pl.pallas_call(
        regressor_kernel,
        out_shape=jax.ShapeDtypeStruct((B, 1), jnp.float32),
        grid=(grid_n,),
        in_specs=[
            pl.BlockSpec((TB, 100), lambda i: (i, 0)),   # x tile streams through
            pl.BlockSpec((TB, 2), lambda i: (i, 0)),     # count/readability
            pl.BlockSpec((100, 50), lambda i: (0, 0)),   # weights stay resident
            pl.BlockSpec((1, 50), lambda i: (0, 0)),
            pl.BlockSpec((1, 50), lambda i: (0, 0)),
            pl.BlockSpec(memory_space=pltpu.MemorySpace.SMEM),
        ],
        out_specs=pl.BlockSpec((TB, 1), lambda i: (i, 0)),
        compiler_params=pltpu.CompilerParams(
            dimension_semantics=("parallel",)),
        cost_estimate=cost,
    )(x, cr, w1, b1_2d, w2h, scal)
    return out


def init_params(key):
    """Deterministic init matching PyTorch nn.Linear default U(-1/sqrt(fan_in), +)."""
    k1, k2, k3, k4 = jax.random.split(key, 4)
    bound1 = 1.0 / jnp.sqrt(100.0)
    bound2 = 1.0 / jnp.sqrt(52.0)
    return {
        # stored already transposed: (in_features, out_features)
        "w1": jax.random.uniform(k1, (100, 50), jnp.float32, -bound1, bound1),
        "b1": jax.random.uniform(k2, (50,), jnp.float32, -bound1, bound1),
        "w2": jax.random.uniform(k3, (52, 1), jnp.float32, -bound2, bound2),
        "b2": jax.random.uniform(k4, (1,), jnp.float32, -bound2, bound2),
    }


def reference_forward(x, count, readability, params):
    """Pure-JAX reference (mirrors the PyTorch forward, eval mode)."""
    h = jnp.maximum(x @ params["w1"] + params["b1"], 0.0)
    z = jnp.concatenate([h, count, readability], axis=1)
    return z @ params["w2"] + params["b2"]


if __name__ == "__main__":
    key = jax.random.PRNGKey(0)
    kx, kp = jax.random.split(key, 2)
    params = init_params(kp)

    def make_inputs(B):
        kxb, kcb, krb = jax.random.split(jax.random.fold_in(kx, B), 3)
        return (jax.random.normal(kxb, (B, 100), jnp.float32),
                jax.random.normal(kcb, (B, 1), jnp.float32),
                jax.random.normal(krb, (B, 1), jnp.float32))

    # f32 path, tight tolerance.  B=8/50: single full-array block;
    # B=2048: two full tiles; B=1300: ragged batch with a partial last tile.
    for B in (8, 50, 1300, 2048):
        x, count, readability = make_inputs(B)
        out = jax.block_until_ready(
            regressor_forward(x, count, readability, params, use_bf16=False))
        ref = reference_forward(x, count, readability, params)
        assert out.shape == (B, 1)
        assert jnp.allclose(out, ref, atol=5e-4, rtol=5e-4), f"f32 mismatch B={B}"

    # Default bf16 x/w1 path (f32 accumulation), looser tolerance.
    for B in (8, 1300):
        x, count, readability = make_inputs(B)
        out = jax.block_until_ready(
            regressor_forward(x, count, readability, params))
        ref = reference_forward(x, count, readability, params)
        assert out.shape == (B, 1)
        assert jnp.allclose(out, ref, atol=3e-2, rtol=3e-2), f"bf16 mismatch B={B}"

    print("KERNEL_OK")
</pallas_src>

<mosaic_0001>
module attributes {stable_mosaic.version = 11 : i64} {
  func.func @regressor_kernel(%arg0: i32, %arg1: memref<8x100xf32, #tpu.memory_space<vmem>>, %arg2: memref<8x2xf32, #tpu.memory_space<vmem>>, %arg3: memref<100x50xf32, #tpu.memory_space<vmem>>, %arg4: memref<1x50xf32, #tpu.memory_space<vmem>>, %arg5: memref<1x50xf32, #tpu.memory_space<vmem>>, %arg6: memref<3xf32, #tpu.memory_space<smem>>, %arg7: memref<8x1xf32, #tpu.memory_space<vmem>>) attributes {dimension_semantics = [#tpu.dimension_semantics<parallel>], iteration_bounds = array<i64: 1>, scalar_prefetch = 0 : i64, scratch_operands = 0 : i64, tpu.core_type = #tpu.core_type<tc>, window_params = [{transform_indices = @transform_0, window_bounds = array<i64: 8, 100>}, {transform_indices = @transform_1, window_bounds = array<i64: 8, 2>}, {pipeline_mode = #tpu.pipeline_mode<synchronous>, transform_indices = @transform_2, window_bounds = array<i64: 100, 50>}, {pipeline_mode = #tpu.pipeline_mode<synchronous>, transform_indices = @transform_3, window_bounds = array<i64: 1, 50>}, {pipeline_mode = #tpu.pipeline_mode<synchronous>, transform_indices = @transform_4, window_bounds = array<i64: 1, 50>}, {transform_indices = @transform_5, window_bounds = array<i64: 3>}, {transform_indices = @transform_6, window_bounds = array<i64: 8, 1>}]} {
    %c0 = arith.constant 0 : index
    %c0_0 = arith.constant 0 : index
    %0 = vector.load %arg1[%c0, %c0_0] : memref<8x100xf32, #tpu.memory_space<vmem>>, vector<8x100xf32>
    %c0_1 = arith.constant 0 : index
    %c0_2 = arith.constant 0 : index
    %1 = vector.load %arg3[%c0_1, %c0_2] : memref<100x50xf32, #tpu.memory_space<vmem>>, vector<100x50xf32>
    %cst = arith.constant dense<0.000000e+00> : vector<8x50xf32>
    %2 = tpu.matmul %0, %1, %cst {dimension_numbers = #tpu.dot_dimension_numbers<[1], [0], [0], [1], [0, 0, 1, 1], [], []>} : vector<8x100xf32>, vector<100x50xf32>, vector<8x50xf32> -> vector<8x50xf32>
    %c0_3 = arith.constant 0 : index
    %c0_4 = arith.constant 0 : index
    %3 = vector.load %arg4[%c0_3, %c0_4] : memref<1x50xf32, #tpu.memory_space<vmem>>, vector<1x50xf32>
    %4 = vector.broadcast %3 : vector<1x50xf32> to vector<8x50xf32>
    %5 = arith.addf %2, %4 : vector<8x50xf32>
    %cst_5 = arith.constant 0.000000e+00 : f32
    %6 = vector.broadcast %cst_5 : f32 to vector<8x50xf32>
    %7 = arith.maximumf %5, %6 : vector<8x50xf32>
    %c0_6 = arith.constant 0 : index
    %c0_7 = arith.constant 0 : index
    %8 = vector.load %arg5[%c0_6, %c0_7] : memref<1x50xf32, #tpu.memory_space<vmem>>, vector<1x50xf32>
    %9 = vector.broadcast %8 : vector<1x50xf32> to vector<8x50xf32>
    %10 = arith.mulf %7, %9 : vector<8x50xf32>
    %cst_8 = arith.constant dense<0.000000e+00> : vector<8xf32>
    %11 = vector.multi_reduction <add>, %10, %cst_8 [1] : vector<8x50xf32> to vector<8xf32>
    %12 = vector.shape_cast %11 : vector<8xf32> to vector<8x1xf32>
    %c0_9 = arith.constant 0 : index
    %c0_10 = arith.constant 0 : index
    %13 = vector.load %arg2[%c0_9, %c0_10] : memref<8x2xf32, #tpu.memory_space<vmem>>, vector<8x1xf32>
    %c0_11 = arith.constant 0 : index
    %c1 = arith.constant 1 : index
    %14 = vector.load %arg2[%c0_11, %c1] : memref<8x2xf32, #tpu.memory_space<vmem>>, vector<8x1xf32>
    %c0_12 = arith.constant 0 : index
    %15 = memref.load %arg6[%c0_12] : memref<3xf32, #tpu.memory_space<smem>>
    %16 = vector.broadcast %15 : f32 to vector<8x1xf32>
    %17 = arith.mulf %13, %16 : vector<8x1xf32>
    %18 = arith.addf %12, %17 : vector<8x1xf32>
    %c1_13 = arith.constant 1 : index
    %19 = memref.load %arg6[%c1_13] : memref<3xf32, #tpu.memory_space<smem>>
    %20 = vector.broadcast %19 : f32 to vector<8x1xf32>
    %21 = arith.mulf %14, %20 : vector<8x1xf32>
    %22 = arith.addf %18, %21 : vector<8x1xf32>
    %c2 = arith.constant 2 : index
    %23 = memref.load %arg6[%c2] : memref<3xf32, #tpu.memory_space<smem>>
    %24 = vector.broadcast %23 : f32 to vector<8x1xf32>
    %25 = arith.addf %22, %24 : vector<8x1xf32>
    %c0_14 = arith.constant 0 : index
    %c0_15 = arith.constant 0 : index
    %26 = vector.load %arg7[%c0_14, %c0_15] : memref<8x1xf32, #tpu.memory_space<vmem>>, vector<8x1xf32>
    tpu.vector_store %arg7[%c0_14, %c0_15], %25 {strides = array<i32>} : memref<8x1xf32, #tpu.memory_space<vmem>>, vector<8x1xf32>,
    return
  }
  func.func @transform_0(%arg0: i32) -> (i32, i32) {
    %c0_i32 = arith.constant 0 : i32
    %c0_i32_0 = arith.constant 0 : i32
    return %arg0, %c0_i32 : i32, i32
  }
  func.func @transform_1(%arg0: i32) -> (i32, i32) {
    %c0_i32 = arith.constant 0 : i32
    %c0_i32_0 = arith.constant 0 : i32
    return %arg0, %c0_i32 : i32, i32
  }
  func.func @transform_2(%arg0: i32) -> (i32, i32) {
    %c0_i32 = arith.constant 0 : i32
    %c0_i32_0 = arith.constant 0 : i32
    %c0_i32_1 = arith.constant 0 : i32
    return %c0_i32, %c0_i32_0 : i32, i32
  }
  func.func @transform_3(%arg0: i32) -> (i32, i32) {
    %c0_i32 = arith.constant 0 : i32
    %c0_i32_0 = arith.constant 0 : i32
    %c0_i32_1 = arith.constant 0 : i32
    return %c0_i32, %c0_i32_0 : i32, i32
  }
  func.func @transform_4(%arg0: i32) -> (i32, i32) {
    %c0_i32 = arith.constant 0 : i32
    %c0_i32_0 = arith.constant 0 : i32
    %c0_i32_1 = arith.constant 0 : i32
    return %c0_i32, %c0_i32_0 : i32, i32
  }
  func.func @transform_5(%arg0: i32) -> i32 {
    %c0_i32 = arith.constant 0 : i32
    %c0_i32_0 = arith.constant 0 : i32
    return %c0_i32 : i32
  }
  func.func @transform_6(%arg0: i32) -> (i32, i32) {
    %c0_i32 = arith.constant 0 : i32
    %c0_i32_0 = arith.constant 0 : i32
    return %arg0, %c0_i32 : i32, i32
  }
}

</mosaic_0001>

<llo_original>
// kernel: tpu_custom_call.1
$region0: #{tpu_custom_call.1}
  #allocation0 [shape = 'u32[]', space=smem, size = 0x4, offset = 0x4, fixed_abs, tag = 'smem constant byte address 0x4 - core index']
  #allocation1 [shape = 'u32[144,128]{1,0:T(1,128)}', space=vmem, size = 0x12000, scoped, tag = 'internal scratch']
  %s0 = inlined_call_operand.vmem [shape: f32[8,100], index: 0, kind: input, shape index: {}]
  %s1 = inlined_call_operand.vmem [shape: f32[8,2], index: 1, kind: input, shape index: {}]
  %s2 = inlined_call_operand.vmem [shape: f32[100,50], index: 2, kind: input, shape index: {}]
  %s3 = inlined_call_operand.vmem [shape: f32[1,50], index: 3, kind: input, shape index: {}]
  %s4 = inlined_call_operand.vmem [shape: f32[1,50], index: 4, kind: input, shape index: {}]
  %s5 = inlined_call_operand.vmem [shape: f32[3], index: 5, kind: input, shape index: {}]
  %s6 = inlined_call_operand.vmem [shape: f32[8,1], index: 6, kind: output, shape index: {}]
  %s7 = sld [smem:[#allocation0]]
  $region38: #{tpu_custom_call.1} parent=0
    _
  %s9 = ssub.s32 1, %s7
  %s10 = scalar_select 0, %s9, %s7
  $region1: #{tpu_custom_call.1} parent=0
    #allocation2 [shape = 'u8[512]{0}', space=smem, size = 0x200, scoped, tag = 'input window, operand 5, single buffered']
    #allocation3 [shape = 's32[1]{0}', space=sflag, size = 0x4, scoped, tag = 'scoped memory for tpu_custom_call.1']
    %11 = vsyncpa [#allocation3], 0
    // Predicated region
    $region2: #{tpu_custom_call.1} parent=1 // pred_check
      _
    $region3: #{tpu_custom_call.1} parent=1 // pred_check_branch
      %13 = sbr.rel (0) target = $region5
    $region4: #{tpu_custom_call.1} parent=1 // pred_region
      _
    $region5: #{tpu_custom_call.1} parent=1 // pred_fallthru
      _
    // Predicated region
    $region6: #{tpu_custom_call.1} parent=1 // pred_check
      _
    $region7: #{tpu_custom_call.1} parent=1 // pred_check_branch
      %15 = sbr.rel (0) target = $region9
    $region8: #{tpu_custom_call.1} parent=1 // pred_region
      _
    $region9: #{tpu_custom_call.1} parent=1 // pred_fallthru
      _
    // Predicated region
    $region10: #{tpu_custom_call.1} parent=1 // pred_check
      _
    $region11: #{tpu_custom_call.1} parent=1 // pred_check_branch
      %17 = sbr.rel (0) target = $region13
    $region12: #{tpu_custom_call.1} parent=1 // pred_region
      _
    $region13: #{tpu_custom_call.1} parent=1 // pred_fallthru
      _
    // Predicated region
    $region14: #{tpu_custom_call.1} parent=1 // pred_check
      _
    $region15: #{tpu_custom_call.1} parent=1 // pred_check_branch
      %19 = sbr.rel (0) target = $region17
    $region16: #{tpu_custom_call.1} parent=1 // pred_region
      _
    $region17: #{tpu_custom_call.1} parent=1 // pred_fallthru
      _
    // Predicated region
    $region18: #{tpu_custom_call.1} parent=1 // pred_check
      _
    $region19: #{tpu_custom_call.1} parent=1 // pred_check_branch
      %21 = sbr.rel (0) target = $region21
    $region20: #{tpu_custom_call.1} parent=1 // pred_region
      _
    $region21: #{tpu_custom_call.1} parent=1 // pred_fallthru
      _
    // Predicated region
    $region22: #{tpu_custom_call.1} parent=1 // pred_check
      _
    $region23: #{tpu_custom_call.1} parent=1 // pred_check_branch
      %23 = sbr.rel (0) target = $region25
    $region24: #{tpu_custom_call.1} parent=1 // pred_region
      %s25 = ssub.s32 16, 16
      %26 = vsyncadd [#allocation3], %s25
      %s28 = sshll.u32 %s5, 4
      %s29 = int_to_ptr.vmem [resolvable:$true] %s28
      %31 = dma.vmem_to_smem %s29, 16, [#allocation2], [#allocation3]
    $region25: #{tpu_custom_call.1} parent=1 // pred_fallthru
      _
    // Predicated region
    $region26: #{tpu_custom_call.1} parent=1 // pred_check
      _
    $region27: #{tpu_custom_call.1} parent=1 // pred_check_branch
      %33 = sbr.rel (0) target = $region29
    $region28: #{tpu_custom_call.1} parent=1 // pred_region
      %34 = dma.done [#allocation3], 16
    $region29: #{tpu_custom_call.1} parent=1 // pred_fallthru
      _
    %35 = sfence
    %v36 = vld [vmem:[%s0] sm:$0xff]
    %v37 = vld [vmem:[%s2] sm:$0xff]
    %v38 = vld [vmem:[%s2 + $0x8] sm:$0xff]
    %v39 = vld [vmem:[%s2 + $0x10] sm:$0xff]
    %v40 = vld [vmem:[%s2 + $0x18] sm:$0xff]
    %v41 = vld [vmem:[%s2 + $0x20] sm:$0xff]
    %v42 = vld [vmem:[%s2 + $0x28] sm:$0xff]
    %v43 = vld [vmem:[%s2 + $0x30] sm:$0xff]
    %v44 = vld [vmem:[%s2 + $0x38] sm:$0xff]
    %v45 = vld [vmem:[%s2 + $0x40] sm:$0xff]
    %v46 = vld [vmem:[%s2 + $0x48] sm:$0xff]
    %v47 = vld [vmem:[%s2 + $0x50] sm:$0xff]
    %v48 = vld [vmem:[%s2 + $0x58] sm:$0xff]
    %v49 = vld [vmem:[%s2 + $0x60] sm:$0xf]
    %v50 = vld [vmem:[%s3] sm:$0x1]
    %v52 = vlaneseq
    %v53 = vshrl.u32 %v52, 7
    %v54 = vsub.s32 0, %v53
    %v55 = vrot.slane %v50, %v54
    %vm57 = vcmask 818176
    %v59 = vsel %vm57, %v36, 0
    %vm61 = vcmask 1043456
    %v63 = vsel %vm61, %v49, 0
    %65 = vmatprep.subr.mxu0 0.0
    %66 = vmatpush1.msra.mxu0 %v37
    %67 = vmatprep.subr.mxu0 0.0
    %68 = vmatpush1.msra.mxu0 %v38
    %69 = vmatprep.subr.mxu0 0.0
    %70 = vmatpush1.msra.mxu0 %v39
    %71 = vmatprep.subr.mxu0 0.0
    %72 = vmatpush1.msra.mxu0 %v40
    %73 = vmatprep.subr.mxu0 0.0
    %74 = vmatpush1.msra.mxu0 %v41
    %75 = vmatprep.subr.mxu0 0.0
    %76 = vmatpush1.msra.mxu0 %v42
    %77 = vmatprep.subr.mxu0 0.0
    %78 = vmatpush1.msra.mxu0 %v43
    %79 = vmatprep.subr.mxu0 0.0
    %80 = vmatpush1.msra.mxu0 %v44
    %81 = vmatprep.subr.mxu0 0.0
    %82 = vmatpush1.msra.mxu0 %v45
    %83 = vmatprep.subr.mxu0 0.0
    %84 = vmatpush1.msra.mxu0 %v46
    %85 = vmatprep.subr.mxu0 0.0
    %86 = vmatpush1.msra.mxu0 %v47
    %87 = vmatprep.subr.mxu0 0.0
    %88 = vmatpush1.msra.mxu0 %v48
    %89 = vmatprep.subr.mxu0 0.0
    %90 = vmatpush1.msra.mxu0 %v63
    %91 = vmatprep.subr.mxu0 0.0
    %92 = vmatpush1.msra.mxu0 0.0
    %93 = vmatprep.subr.mxu0 0.0
    %94 = vmatpush1.msra.mxu0 0.0
    %95 = vmatprep.subr.mxu0 0.0
    %96 = vmatpush1.msra.mxu0 0.0
    %97 = vmatprep.subr.mxu0 0.0
    %98 = vmatpush1.msra.mxu0 0.0
    %99 = vmatprep.subr.mxu0 0.0
    %100 = vmatpush1.msra.mxu0 0.0
    %101 = vmatprep.subr.mxu0 0.0
    %102 = vmatpush1.msra.mxu0 0.0
    %103 = vmatprep.subr.mxu0 0.0
    %104 = vmatpush1.msra.mxu0 0.0
    %105 = vmatprep.subr.mxu0 0.0
    %106 = vmatpush1.msra.mxu0 0.0
    %107 = vmatprep.subr.mxu0 0.0
    %108 = vmatpush1.msra.mxu0 0.0
    %109 = vmatprep.subr.mxu0 0.0
    %110 = vmatpush1.msra.mxu0 0.0
    %111 = vmatprep.subr.mxu0 0.0
    %112 = vmatpush1.msra.mxu0 0.0
    %113 = vmatprep.subr.mxu0 0.0
    %114 = vmatpush1.msra.mxu0 0.0
    %115 = vmatprep.subr.mxu0 0.0
    %116 = vmatpush1.msra.mxu0 0.0
    %117 = vmatprep.subr.mxu0 0.0
    %118 = vmatpush1.msra.mxu0 0.0
    %119 = vmatprep.subr.mxu0 0.0
    %120 = vmatpush1.msra.mxu0 0.0
    %121 = vmatprep.subr.mxu0 0.0
    %122 = vmatpush1.msra.mxu0 0.0
    %123 = vmatprep.subr.mxu0 0.0
    %124 = vmatpush1.msra.mxu0 0.0
    %125 = vmatprep.subr.mxu0 0.0
    %126 = vmatpush1.msra.mxu0 0.0
    %127 = vmatprep.subr.mxu0 0.0
    %128 = vmatpush1.msra.mxu0 0.0
    %129 = vmatprep.mubr.f32.mxu0 0.0
    %130 = vmatmul.mubr.f32.gmra.mrb[0].mxu0 %v59
    %v131 = vpop.f32.mrb[0].mxu0
    %v132 = vadd.f32 %v55, %v131
    %v133 = vpop.f32.mrb[0].mxu0
    %134 = vdwg.mxu0
    %v135 = vmax.f32 %v132, 0.0
    %v136 = vld [vmem:[%s4] sm:$0x1]
    %v138 = vlaneseq
    %v139 = vshrl.u32 %v138, 7
    %v140 = vsub.s32 0, %v139
    %v141 = vrot.slane %v136, %v140
    %v143 = vmul.f32 %v135, %v141
    %vm144 = vcmask 408576
    %v145 = vsel %vm144, %v143, 0.0
    %146 = vadd.xlane.f32.xlu0 %v145
    %v147 = vpop.xlane.xlu0 %146
    %v148 = vld [vmem:[%s1] sm:$0xff]
    %s149 = sld [smem:[#allocation2]]
    %v150 = vstv %s149
    %v151 = vmul.f32 %v148, %v150
    %v152 = vadd.f32 %v147, %v151
    %s153 = sld [smem:[#allocation2 + $0x1]]
    %v154 = vstv %s153
    %v155 = vmul.f32 %v148, %v154
    %157 = vrot.lane.b32.xlu0 %v155, 127
    %v158 = vpop.permute.xlu0 %157
    %v160 = vadd.f32 %v152, %v158
    %s161 = sld [smem:[#allocation2 + $0x2]]
    %v162 = vstv %s161
    %v163 = vadd.f32 %v160, %v162
    %vm164 = vcmask 7168
    %165 = vst.msk [vmem:[%s6] sm:$0xff] %vm164, %v163
    // Predicated region
    $region30: #{tpu_custom_call.1} parent=1 // pred_check
      _
    $region31: #{tpu_custom_call.1} parent=1 // pred_check_branch
      %167 = sbr.rel (0) target = $region33
    $region32: #{tpu_custom_call.1} parent=1 // pred_region
      _
    $region33: #{tpu_custom_call.1} parent=1 // pred_fallthru
      _
    // Predicated region
    $region34: #{tpu_custom_call.1} parent=1 // pred_check
      _
    $region35: #{tpu_custom_call.1} parent=1 // pred_check_branch
      %169 = sbr.rel (0) target = $region37
    $region36: #{tpu_custom_call.1} parent=1 // pred_region
      _
    $region37: #{tpu_custom_call.1} parent=1 // pred_fallthru
      _
    %170 = vsyncpa [#allocation3], 1

</llo_original>
